<compile_context>
chip_gen: v6e
topology: v6e:2x2x1
jax: 0.10.0
libtpu: 0.0.40
codegen_flags: <defaults>
</compile_context>

<pallas_src>
import functools

import jax
import jax.numpy as jnp
from jax.experimental import pallas as pl
from jax.experimental.pallas import tpu as pltpu


def _mha_kernel(depth, approx_softmax,
                idx_ref,                       # SMEM (b,) int32  (scalar prefetch)
                x_ref,                         # VMEM (1, T, d_emb) f32
                pos_ref,                       # VMEM (T, head*H)  f32  (pos*w0p + b0, all heads)
                w0e_ref,                       # VMEM (d_emb, head*H)   compute dtype
                wqkv_ref,                      # VMEM (head, H, 3H)     compute dtype
                bqkv_ref,                      # VMEM (head, 1, 3H)     f32
                w1_ref,                        # VMEM (head, H, H)      compute dtype
                b1_ref,                        # VMEM (head, 1, H)      f32
                out_ref,                       # VMEM (1, 1, head*H)    f32
                hs_fin_ref):                   # VMEM scratch (T, head*H) f32
    head, H, _ = w1_ref.shape
    i = pl.program_id(0)                       # batch element handled by this step
    cdt = wqkv_ref.dtype                       # MXU input dtype (f32 or bf16)

    x = x_ref[0]                               # (T, d_emb) f32

    # fc0 fused across all heads: one wide matmul + precomputed position/bias term.
    hs_all = jnp.maximum(
        jnp.dot(x.astype(w0e_ref.dtype), w0e_ref[...],
                preferred_element_type=jnp.float32) + pos_ref[...],
        0.0)                                   # (T, head*H)

    # head is small & static -> unrolled loop; each head is an independent
    # SelfAttention module with its own weights.
    for h in range(head):
        hs = hs_all[:, h * H:(h + 1) * H]      # (T, H) f32
        wqkv = wqkv_ref[h]                     # (H, 3H)
        bqkv = bqkv_ref[h]                     # (1, 3H) f32
        w1 = w1_ref[h]                         # (H, H)
        b1 = b1_ref[h]                         # (1, H)  f32

        # depth is static & small -> unrolled.
        for _ in range(depth):
            qkv = jnp.tanh(
                jnp.dot(hs.astype(cdt), wqkv,
                        preferred_element_type=jnp.float32) + bqkv)     # (T, 3H)
            q = qkv[:, :H].astype(cdt)
            k = qkv[:, H:2 * H].astype(cdt)
            v = qkv[:, 2 * H:].astype(cdt)

            # per-batch attention (one batch element per grid step) — unscaled,
            # matching the PyTorch reference.
            a = jnp.dot(q, k.T, preferred_element_type=jnp.float32)     # (T, T)
            a_max = jnp.max(a, axis=-1, keepdims=True)
            p = jnp.exp(a - a_max)
            denom = jnp.sum(p, axis=-1, keepdims=True)
            p = p * pl.reciprocal(denom, approx=approx_softmax)         # EUP slot

            c = jnp.dot(p.astype(cdt), v,
                        preferred_element_type=jnp.float32)             # (T, H)
            hs = jnp.maximum(
                jnp.dot(c.astype(cdt), w1,
                        preferred_element_type=jnp.float32) + b1, 0.0)  # (T, H)

        # stack this head's hidden states into the lane-aligned slab h*H:(h+1)*H
        hs_fin_ref[:, h * H:(h + 1) * H] = hs

    # final per-row gather: idx is scalar-prefetched in SMEM; one dynamic sublane
    # read + one dense lane store.
    row = idx_ref[i]
    out_ref[0] = hs_fin_ref[pl.ds(row, 1), :].astype(out_ref.dtype)


def attention_net_forward(embedding, idx, params, *, depth,
                          compute_dtype=jnp.float32,
                          approx_softmax=True):
    """AttentionNet.forward (use_rpr=False path).

    embedding: [b, T, d_emb] float32
    idx:       [b] int32
    params (PyTorch nn.Linear layout, stacked per head):
        w0: [head, H, d_emb+1], b0: [head, 1, H]
        wq/wk/wv/w1: [head, H, H], bq/bk/bv/b1: [head, 1, H]
    returns: [b, head * H] float32
    """
    b, T, d_emb = embedding.shape
    head, H, D_in = params['w0'].shape
    assert D_in == d_emb + 1

    # --- one-time weight re-layout (outside the kernel):
    #   * [out, in] -> [in, out] so the kernel never transposes the RHS
    #   * fuse fc0 across heads into a single (d_emb, head*H) weight
    #   * fold fc0's position column + bias into a precomputed (T, head*H) bias
    #   * fuse q/k/v into one [H, 3H] projection per head
    #   * biases stay f32; only matmul weights get compute_dtype
    w0T = jnp.transpose(params['w0'], (0, 2, 1))                       # [head, D_in, H]
    w0e_all = jnp.transpose(w0T[:, :d_emb, :], (1, 0, 2)) \
                 .reshape(d_emb, head * H).astype(compute_dtype)       # [d_emb, head*H]
    w0p = w0T[:, d_emb, :]                                             # [head, H] f32
    b0 = params['b0'][:, 0, :]                                         # [head, H] f32
    pos = jnp.arange(T, dtype=jnp.float32) / T                         # [T]
    pos_bias = (pos[:, None, None] * w0p[None] + b0[None]) \
                 .reshape(T, head * H).astype(jnp.float32)             # [T, head*H]

    wqkv = jnp.concatenate(
        [jnp.transpose(params[n], (0, 2, 1)) for n in ('wq', 'wk', 'wv')],
        axis=-1).astype(compute_dtype)                                 # [head, H, 3H]
    bqkv = jnp.concatenate(
        [params['bq'], params['bk'], params['bv']],
        axis=-1).astype(jnp.float32)                                   # [head, 1, 3H]
    w1 = jnp.transpose(params['w1'], (0, 2, 1)).astype(compute_dtype)  # [head, H, H]
    b1 = params['b1'].astype(jnp.float32)                              # [head, 1, H]

    idx_i32 = idx.astype(jnp.int32)
    x = embedding.astype(jnp.float32)

    kernel = functools.partial(_mha_kernel, depth, approx_softmax)

    grid_spec = pltpu.PrefetchScalarGridSpec(
        num_scalar_prefetch=1,                 # idx -> SMEM, visible to index_maps & kernel
        grid=(b,),                             # one batch element per (parallel) grid step
        in_specs=[
            pl.BlockSpec((1, T, d_emb), lambda i, idx_ref: (i, 0, 0)),     # x
            pl.BlockSpec((T, head * H), lambda i, idx_ref: (0, 0)),        # pos_bias
            pl.BlockSpec((d_emb, head * H), lambda i, idx_ref: (0, 0)),    # w0e_all
            pl.BlockSpec((head, H, 3 * H), lambda i, idx_ref: (0, 0, 0)),  # wqkv
            pl.BlockSpec((head, 1, 3 * H), lambda i, idx_ref: (0, 0, 0)),  # bqkv
            pl.BlockSpec((head, H, H), lambda i, idx_ref: (0, 0, 0)),      # w1
            pl.BlockSpec((head, 1, H), lambda i, idx_ref: (0, 0, 0)),      # b1
        ],
        out_specs=pl.BlockSpec((1, 1, head * H), lambda i, idx_ref: (i, 0, 0)),
        scratch_shapes=[pltpu.VMEM((T, head * H), jnp.float32)],
    )

    out = pl.pallas_call(
        kernel,
        out_shape=jax.ShapeDtypeStruct((b, 1, head * H), jnp.float32),
        grid_spec=grid_spec,
        compiler_params=pltpu.CompilerParams(
            dimension_semantics=("parallel",)),
    )(idx_i32, x, pos_bias, w0e_all, wqkv, bqkv, w1, b1)

    return out.reshape(b, head * H)


def _reference_forward(embedding, idx, params, *, depth):
    """Pure-JAX reference of the same computation for a correctness check."""
    b, T, d_emb = embedding.shape
    head, H, D_in = params['w0'].shape
    pos = jnp.broadcast_to((jnp.arange(T, dtype=jnp.float32) / T)[None, :, None],
                           (b, T, 1))
    x = jnp.concatenate([embedding, pos], axis=2)
    ys = []
    for h in range(head):
        hs = jax.nn.relu(jnp.einsum('bti,oi->bto', x, params['w0'][h]) + params['b0'][h])
        for _ in range(depth):
            q = jnp.tanh(jnp.einsum('bti,oi->bto', hs, params['wq'][h]) + params['bq'][h])
            k = jnp.tanh(jnp.einsum('bti,oi->bto', hs, params['wk'][h]) + params['bk'][h])
            v = jnp.tanh(jnp.einsum('bti,oi->bto', hs, params['wv'][h]) + params['bv'][h])
            a = jax.nn.softmax(jnp.einsum('btd,bsd->bts', q, k), axis=-1)
            c = jnp.einsum('bts,bsd->btd', a, v)
            hs = jax.nn.relu(jnp.einsum('bti,oi->bto', c, params['w1'][h]) + params['b1'][h])
        ys.append(hs)
    hs_all = jnp.concatenate(ys, axis=2)
    return hs_all[jnp.arange(b), idx]


def _init_params(key, *, head, hidden, d_in):
    ks = jax.random.split(key, 10)
    scale = 0.1
    return {
        'w0': scale * jax.random.normal(ks[0], (head, hidden, d_in), jnp.float32),
        'b0': scale * jax.random.normal(ks[1], (head, 1, hidden), jnp.float32),
        'wq': scale * jax.random.normal(ks[2], (head, hidden, hidden), jnp.float32),
        'bq': scale * jax.random.normal(ks[3], (head, 1, hidden), jnp.float32),
        'wk': scale * jax.random.normal(ks[4], (head, hidden, hidden), jnp.float32),
        'bk': scale * jax.random.normal(ks[5], (head, 1, hidden), jnp.float32),
        'wv': scale * jax.random.normal(ks[6], (head, hidden, hidden), jnp.float32),
        'bv': scale * jax.random.normal(ks[7], (head, 1, hidden), jnp.float32),
        'w1': scale * jax.random.normal(ks[8], (head, hidden, hidden), jnp.float32),
        'b1': scale * jax.random.normal(ks[9], (head, 1, hidden), jnp.float32),
    }


if __name__ == "__main__":
    # AttentionNet(input_size=d_emb+1, hidden_size=32, depth=1, head=2, k=None)
    b, T, d_emb = 2, 8, 4
    hidden, depth, head = 32, 1, 2
    d_in = d_emb + 1   # pos column appended when use_rpr == False

    key = jax.random.PRNGKey(0)
    k_emb, k_idx, k_par = jax.random.split(key, 3)
    embedding = jax.random.normal(k_emb, (b, T, d_emb), jnp.float32)
    idx = jax.random.randint(k_idx, (b,), 0, T, jnp.int32)
    params = _init_params(k_par, head=head, hidden=hidden, d_in=d_in)

    out = attention_net_forward(embedding, idx, params, depth=depth)
    out = jax.block_until_ready(out)

    ref = _reference_forward(embedding, idx, params, depth=depth)
    assert out.shape == (b, head * hidden), out.shape
    # tolerance relaxed slightly vs exact f32 because the softmax denominator uses
    # the EUP approximate reciprocal (pass approx_softmax=False for exact).
    assert jnp.allclose(out, ref, atol=5e-3, rtol=5e-3), "mismatch vs reference"

    print("KERNEL_OK")
</pallas_src>

<mosaic_0001>
module attributes {stable_mosaic.version = 11 : i64} {
  func.func @_mha_kernel(%arg0: i32, %arg1: memref<2xi32, #tpu.memory_space<smem>>, %arg2: memref<1x8x4xf32, #tpu.memory_space<vmem>>, %arg3: memref<8x64xf32, #tpu.memory_space<vmem>>, %arg4: memref<4x64xf32, #tpu.memory_space<vmem>>, %arg5: memref<2x32x96xf32, #tpu.memory_space<vmem>>, %arg6: memref<2x1x96xf32, #tpu.memory_space<vmem>>, %arg7: memref<2x32x32xf32, #tpu.memory_space<vmem>>, %arg8: memref<2x1x32xf32, #tpu.memory_space<vmem>>, %arg9: memref<1x1x64xf32, #tpu.memory_space<vmem>>, %arg10: memref<8x64xf32, #tpu.memory_space<vmem>>) attributes {dimension_semantics = [#tpu.dimension_semantics<parallel>], iteration_bounds = array<i64: 2>, scalar_prefetch = 1 : i64, scratch_operands = 1 : i64, tpu.core_type = #tpu.core_type<tc>, window_params = [{transform_indices = @transform_0, window_bounds = array<i64: 1, 8, 4>}, {pipeline_mode = #tpu.pipeline_mode<synchronous>, transform_indices = @transform_1, window_bounds = array<i64: 8, 64>}, {pipeline_mode = #tpu.pipeline_mode<synchronous>, transform_indices = @transform_2, window_bounds = array<i64: 4, 64>}, {pipeline_mode = #tpu.pipeline_mode<synchronous>, transform_indices = @transform_3, window_bounds = array<i64: 2, 32, 96>}, {pipeline_mode = #tpu.pipeline_mode<synchronous>, transform_indices = @transform_4, window_bounds = array<i64: 2, 1, 96>}, {pipeline_mode = #tpu.pipeline_mode<synchronous>, transform_indices = @transform_5, window_bounds = array<i64: 2, 32, 32>}, {pipeline_mode = #tpu.pipeline_mode<synchronous>, transform_indices = @transform_6, window_bounds = array<i64: 2, 1, 32>}, {transform_indices = @transform_7, window_bounds = array<i64: 1, 1, 64>}]} {
    %c0 = arith.constant 0 : index
    %c0_0 = arith.constant 0 : index
    %c0_1 = arith.constant 0 : index
    %0 = vector.load %arg2[%c0, %c0_0, %c0_1] : memref<1x8x4xf32, #tpu.memory_space<vmem>>, vector<1x8x4xf32>
    %1 = vector.shape_cast %0 : vector<1x8x4xf32> to vector<8x4xf32>
    %c0_2 = arith.constant 0 : index
    %c0_3 = arith.constant 0 : index
    %2 = vector.load %arg4[%c0_2, %c0_3] : memref<4x64xf32, #tpu.memory_space<vmem>>, vector<4x64xf32>
    %cst = arith.constant dense<0.000000e+00> : vector<8x64xf32>
    %3 = tpu.matmul %1, %2, %cst {dimension_numbers = #tpu.dot_dimension_numbers<[1], [0], [0], [1], [0, 0, 1, 1], [], []>} : vector<8x4xf32>, vector<4x64xf32>, vector<8x64xf32> -> vector<8x64xf32>
    %c0_4 = arith.constant 0 : index
    %c0_5 = arith.constant 0 : index
    %4 = vector.load %arg3[%c0_4, %c0_5] : memref<8x64xf32, #tpu.memory_space<vmem>>, vector<8x64xf32>
    %5 = arith.addf %3, %4 : vector<8x64xf32>
    %cst_6 = arith.constant 0.000000e+00 : f32
    %6 = vector.broadcast %cst_6 : f32 to vector<8x64xf32>
    %7 = arith.maximumf %5, %6 : vector<8x64xf32>
    %8 = vector.extract_strided_slice %7 {offsets = [0, 0], sizes = [8, 32], strides = [1, 1]} : vector<8x64xf32> to vector<8x32xf32>
    %c0_7 = arith.constant 0 : index
    %c0_8 = arith.constant 0 : index
    %c0_9 = arith.constant 0 : index
    %9 = vector.load %arg5[%c0_7, %c0_8, %c0_9] : memref<2x32x96xf32, #tpu.memory_space<vmem>>, vector<1x32x96xf32>
    %10 = vector.shape_cast %9 : vector<1x32x96xf32> to vector<32x96xf32>
    %c0_10 = arith.constant 0 : index
    %c0_11 = arith.constant 0 : index
    %c0_12 = arith.constant 0 : index
    %11 = vector.load %arg6[%c0_10, %c0_11, %c0_12] : memref<2x1x96xf32, #tpu.memory_space<vmem>>, vector<1x1x96xf32>
    %12 = vector.shape_cast %11 : vector<1x1x96xf32> to vector<1x96xf32>
    %c0_13 = arith.constant 0 : index
    %c0_14 = arith.constant 0 : index
    %c0_15 = arith.constant 0 : index
    %13 = vector.load %arg7[%c0_13, %c0_14, %c0_15] : memref<2x32x32xf32, #tpu.memory_space<vmem>>, vector<1x32x32xf32>
    %14 = vector.shape_cast %13 : vector<1x32x32xf32> to vector<32x32xf32>
    %c0_16 = arith.constant 0 : index
    %c0_17 = arith.constant 0 : index
    %c0_18 = arith.constant 0 : index
    %15 = vector.load %arg8[%c0_16, %c0_17, %c0_18] : memref<2x1x32xf32, #tpu.memory_space<vmem>>, vector<1x1x32xf32>
    %16 = vector.shape_cast %15 : vector<1x1x32xf32> to vector<1x32xf32>
    %cst_19 = arith.constant dense<0.000000e+00> : vector<8x96xf32>
    %17 = tpu.matmul %8, %10, %cst_19 {dimension_numbers = #tpu.dot_dimension_numbers<[1], [0], [0], [1], [0, 0, 1, 1], [], []>} : vector<8x32xf32>, vector<32x96xf32>, vector<8x96xf32> -> vector<8x96xf32>
    %18 = vector.broadcast %12 : vector<1x96xf32> to vector<8x96xf32>
    %19 = arith.addf %17, %18 : vector<8x96xf32>
    %20 = math.tanh %19 : vector<8x96xf32>
    %21 = vector.extract_strided_slice %20 {offsets = [0, 0], sizes = [8, 32], strides = [1, 1]} : vector<8x96xf32> to vector<8x32xf32>
    %22 = vector.extract_strided_slice %20 {offsets = [0, 32], sizes = [8, 32], strides = [1, 1]} : vector<8x96xf32> to vector<8x32xf32>
    %23 = vector.extract_strided_slice %20 {offsets = [0, 64], sizes = [8, 32], strides = [1, 1]} : vector<8x96xf32> to vector<8x32xf32>
    %24 = tpu.transpose %22, [1, 0] : vector<8x32xf32> -> vector<32x8xf32>
    %cst_20 = arith.constant dense<0.000000e+00> : vector<8x8xf32>
    %25 = tpu.matmul %21, %24, %cst_20 {dimension_numbers = #tpu.dot_dimension_numbers<[1], [0], [0], [1], [0, 0, 1, 1], [], []>} : vector<8x32xf32>, vector<32x8xf32>, vector<8x8xf32> -> vector<8x8xf32>
    %cst_21 = arith.constant dense<0xFF800000> : vector<8xf32>
    %26 = vector.multi_reduction <maximumf>, %25, %cst_21 [1] : vector<8x8xf32> to vector<8xf32>
    %27 = vector.shape_cast %26 : vector<8xf32> to vector<8x1xf32>
    %28 = vector.broadcast %27 : vector<8x1xf32> to vector<8x8xf32>
    %29 = arith.subf %25, %28 : vector<8x8xf32>
    %30 = math.exp %29 : vector<8x8xf32>
    %cst_22 = arith.constant dense<0.000000e+00> : vector<8xf32>
    %31 = vector.multi_reduction <add>, %30, %cst_22 [1] : vector<8x8xf32> to vector<8xf32>
    %32 = vector.shape_cast %31 : vector<8xf32> to vector<8x1xf32>
    %33 = tpu.reciprocal %32 {approx = true} : vector<8x1xf32> -> vector<8x1xf32>
    %34 = vector.broadcast %33 : vector<8x1xf32> to vector<8x8xf32>
    %35 = arith.mulf %30, %34 : vector<8x8xf32>
    %cst_23 = arith.constant dense<0.000000e+00> : vector<8x32xf32>
    %36 = tpu.matmul %35, %23, %cst_23 {dimension_numbers = #tpu.dot_dimension_numbers<[1], [0], [0], [1], [0, 0, 1, 1], [], []>} : vector<8x8xf32>, vector<8x32xf32>, vector<8x32xf32> -> vector<8x32xf32>
    %cst_24 = arith.constant dense<0.000000e+00> : vector<8x32xf32>
    %37 = tpu.matmul %36, %14, %cst_24 {dimension_numbers = #tpu.dot_dimension_numbers<[1], [0], [0], [1], [0, 0, 1, 1], [], []>} : vector<8x32xf32>, vector<32x32xf32>, vector<8x32xf32> -> vector<8x32xf32>
    %38 = vector.broadcast %16 : vector<1x32xf32> to vector<8x32xf32>
    %39 = arith.addf %37, %38 : vector<8x32xf32>
    %cst_25 = arith.constant 0.000000e+00 : f32
    %40 = vector.broadcast %cst_25 : f32 to vector<8x32xf32>
    %41 = arith.maximumf %39, %40 : vector<8x32xf32>
    %c0_26 = arith.constant 0 : index
    %c0_27 = arith.constant 0 : index
    %42 = vector.load %arg10[%c0_26, %c0_27] : memref<8x64xf32, #tpu.memory_space<vmem>>, vector<8x32xf32>
    tpu.vector_store %arg10[%c0_26, %c0_27], %41 {strides = array<i32>} : memref<8x64xf32, #tpu.memory_space<vmem>>, vector<8x32xf32>,
    %43 = vector.extract_strided_slice %7 {offsets = [0, 32], sizes = [8, 32], strides = [1, 1]} : vector<8x64xf32> to vector<8x32xf32>
    %c1 = arith.constant 1 : index
    %c0_28 = arith.constant 0 : index
    %c0_29 = arith.constant 0 : index
    %44 = vector.load %arg5[%c1, %c0_28, %c0_29] : memref<2x32x96xf32, #tpu.memory_space<vmem>>, vector<1x32x96xf32>
    %45 = vector.shape_cast %44 : vector<1x32x96xf32> to vector<32x96xf32>
    %c1_30 = arith.constant 1 : index
    %c0_31 = arith.constant 0 : index
    %c0_32 = arith.constant 0 : index
    %46 = vector.load %arg6[%c1_30, %c0_31, %c0_32] : memref<2x1x96xf32, #tpu.memory_space<vmem>>, vector<1x1x96xf32>
    %47 = vector.shape_cast %46 : vector<1x1x96xf32> to vector<1x96xf32>
    %c1_33 = arith.constant 1 : index
    %c0_34 = arith.constant 0 : index
    %c0_35 = arith.constant 0 : index
    %48 = vector.load %arg7[%c1_33, %c0_34, %c0_35] : memref<2x32x32xf32, #tpu.memory_space<vmem>>, vector<1x32x32xf32>
    %49 = vector.shape_cast %48 : vector<1x32x32xf32> to vector<32x32xf32>
    %c1_36 = arith.constant 1 : index
    %c0_37 = arith.constant 0 : index
    %c0_38 = arith.constant 0 : index
    %50 = vector.load %arg8[%c1_36, %c0_37, %c0_38] : memref<2x1x32xf32, #tpu.memory_space<vmem>>, vector<1x1x32xf32>
    %51 = vector.shape_cast %50 : vector<1x1x32xf32> to vector<1x32xf32>
    %cst_39 = arith.constant dense<0.000000e+00> : vector<8x96xf32>
    %52 = tpu.matmul %43, %45, %cst_39 {dimension_numbers = #tpu.dot_dimension_numbers<[1], [0], [0], [1], [0, 0, 1, 1], [], []>} : vector<8x32xf32>, vector<32x96xf32>, vector<8x96xf32> -> vector<8x96xf32>
    %53 = vector.broadcast %47 : vector<1x96xf32> to vector<8x96xf32>
    %54 = arith.addf %52, %53 : vector<8x96xf32>
    %55 = math.tanh %54 : vector<8x96xf32>
    %56 = vector.extract_strided_slice %55 {offsets = [0, 0], sizes = [8, 32], strides = [1, 1]} : vector<8x96xf32> to vector<8x32xf32>
    %57 = vector.extract_strided_slice %55 {offsets = [0, 32], sizes = [8, 32], strides = [1, 1]} : vector<8x96xf32> to vector<8x32xf32>
    %58 = vector.extract_strided_slice %55 {offsets = [0, 64], sizes = [8, 32], strides = [1, 1]} : vector<8x96xf32> to vector<8x32xf32>
    %59 = tpu.transpose %57, [1, 0] : vector<8x32xf32> -> vector<32x8xf32>
    %cst_40 = arith.constant dense<0.000000e+00> : vector<8x8xf32>
    %60 = tpu.matmul %56, %59, %cst_40 {dimension_numbers = #tpu.dot_dimension_numbers<[1], [0], [0], [1], [0, 0, 1, 1], [], []>} : vector<8x32xf32>, vector<32x8xf32>, vector<8x8xf32> -> vector<8x8xf32>
    %cst_41 = arith.constant dense<0xFF800000> : vector<8xf32>
    %61 = vector.multi_reduction <maximumf>, %60, %cst_41 [1] : vector<8x8xf32> to vector<8xf32>
    %62 = vector.shape_cast %61 : vector<8xf32> to vector<8x1xf32>
    %63 = vector.broadcast %62 : vector<8x1xf32> to vector<8x8xf32>
    %64 = arith.subf %60, %63 : vector<8x8xf32>
    %65 = math.exp %64 : vector<8x8xf32>
    %cst_42 = arith.constant dense<0.000000e+00> : vector<8xf32>
    %66 = vector.multi_reduction <add>, %65, %cst_42 [1] : vector<8x8xf32> to vector<8xf32>
    %67 = vector.shape_cast %66 : vector<8xf32> to vector<8x1xf32>
    %68 = tpu.reciprocal %67 {approx = true} : vector<8x1xf32> -> vector<8x1xf32>
    %69 = vector.broadcast %68 : vector<8x1xf32> to vector<8x8xf32>
    %70 = arith.mulf %65, %69 : vector<8x8xf32>
    %cst_43 = arith.constant dense<0.000000e+00> : vector<8x32xf32>
    %71 = tpu.matmul %70, %58, %cst_43 {dimension_numbers = #tpu.dot_dimension_numbers<[1], [0], [0], [1], [0, 0, 1, 1], [], []>} : vector<8x8xf32>, vector<8x32xf32>, vector<8x32xf32> -> vector<8x32xf32>
    %cst_44 = arith.constant dense<0.000000e+00> : vector<8x32xf32>
    %72 = tpu.matmul %71, %49, %cst_44 {dimension_numbers = #tpu.dot_dimension_numbers<[1], [0], [0], [1], [0, 0, 1, 1], [], []>} : vector<8x32xf32>, vector<32x32xf32>, vector<8x32xf32> -> vector<8x32xf32>
    %73 = vector.broadcast %51 : vector<1x32xf32> to vector<8x32xf32>
    %74 = arith.addf %72, %73 : vector<8x32xf32>
    %cst_45 = arith.constant 0.000000e+00 : f32
    %75 = vector.broadcast %cst_45 : f32 to vector<8x32xf32>
    %76 = arith.maximumf %74, %75 : vector<8x32xf32>
    %c0_46 = arith.constant 0 : index
    %c32 = arith.constant 32 : index
    %77 = vector.load %arg10[%c0_46, %c32] : memref<8x64xf32, #tpu.memory_space<vmem>>, vector<8x32xf32>
    tpu.vector_store %arg10[%c0_46, %c32], %76 {strides = array<i32>} : memref<8x64xf32, #tpu.memory_space<vmem>>, vector<8x32xf32>,
    %78 = arith.index_cast %arg0 : i32 to index
    %79 = memref.load %arg1[%78] : memref<2xi32, #tpu.memory_space<smem>>
    %80 = arith.index_cast %79 : i32 to index
    %c0_47 = arith.constant 0 : index
    %81 = vector.load %arg10[%80, %c0_47] : memref<8x64xf32, #tpu.memory_space<vmem>>, vector<1x64xf32>
    %c0_48 = arith.constant 0 : index
    %c0_49 = arith.constant 0 : index
    %c0_50 = arith.constant 0 : index
    %82 = vector.load %arg9[%c0_48, %c0_49, %c0_50] : memref<1x1x64xf32, #tpu.memory_space<vmem>>, vector<1x1x64xf32>
    %83 = vector.shape_cast %82 : vector<1x1x64xf32> to vector<1x64xf32>
    %84 = vector.shape_cast %81 : vector<1x64xf32> to vector<1x1x64xf32>
    tpu.vector_store %arg9[%c0_48, %c0_49, %c0_50], %84 {strides = array<i32>} : memref<1x1x64xf32, #tpu.memory_space<vmem>>, vector<1x1x64xf32>,
    return
  }
  func.func @transform_0(%arg0: i32, %arg1: memref<2xi32, #tpu.memory_space<smem>>) -> (i32, i32, i32) {
    %c0_i32 = arith.constant 0 : i32
    %c0_i32_0 = arith.constant 0 : i32
    %c0_i32_1 = arith.constant 0 : i32
    return %arg0, %c0_i32, %c0_i32_0 : i32, i32, i32
  }
  func.func @transform_1(%arg0: i32, %arg1: memref<2xi32, #tpu.memory_space<smem>>) -> (i32, i32) {
    %c0_i32 = arith.constant 0 : i32
    %c0_i32_0 = arith.constant 0 : i32
    %c0_i32_1 = arith.constant 0 : i32
    return %c0_i32, %c0_i32_0 : i32, i32
  }
  func.func @transform_2(%arg0: i32, %arg1: memref<2xi32, #tpu.memory_space<smem>>) -> (i32, i32) {
    %c0_i32 = arith.constant 0 : i32
    %c0_i32_0 = arith.constant 0 : i32
    %c0_i32_1 = arith.constant 0 : i32
    return %c0_i32, %c0_i32_0 : i32, i32
  }
  func.func @transform_3(%arg0: i32, %arg1: memref<2xi32, #tpu.memory_space<smem>>) -> (i32, i32, i32) {
    %c0_i32 = arith.constant 0 : i32
    %c0_i32_0 = arith.constant 0 : i32
    %c0_i32_1 = arith.constant 0 : i32
    %c0_i32_2 = arith.constant 0 : i32
    return %c0_i32, %c0_i32_0, %c0_i32_1 : i32, i32, i32
  }
  func.func @transform_4(%arg0: i32, %arg1: memref<2xi32, #tpu.memory_space<smem>>) -> (i32, i32, i32) {
    %c0_i32 = arith.constant 0 : i32
    %c0_i32_0 = arith.constant 0 : i32
    %c0_i32_1 = arith.constant 0 : i32
    %c0_i32_2 = arith.constant 0 : i32
    return %c0_i32, %c0_i32_0, %c0_i32_1 : i32, i32, i32
  }
  func.func @transform_5(%arg0: i32, %arg1: memref<2xi32, #tpu.memory_space<smem>>) -> (i32, i32, i32) {
    %c0_i32 = arith.constant 0 : i32
    %c0_i32_0 = arith.constant 0 : i32
    %c0_i32_1 = arith.constant 0 : i32
    %c0_i32_2 = arith.constant 0 : i32
    return %c0_i32, %c0_i32_0, %c0_i32_1 : i32, i32, i32
  }
  func.func @transform_6(%arg0: i32, %arg1: memref<2xi32, #tpu.memory_space<smem>>) -> (i32, i32, i32) {
    %c0_i32 = arith.constant 0 : i32
    %c0_i32_0 = arith.constant 0 : i32
    %c0_i32_1 = arith.constant 0 : i32
    %c0_i32_2 = arith.constant 0 : i32
    return %c0_i32, %c0_i32_0, %c0_i32_1 : i32, i32, i32
  }
  func.func @transform_7(%arg0: i32, %arg1: memref<2xi32, #tpu.memory_space<smem>>) -> (i32, i32, i32) {
    %c0_i32 = arith.constant 0 : i32
    %c0_i32_0 = arith.constant 0 : i32
    %c0_i32_1 = arith.constant 0 : i32
    return %arg0, %c0_i32, %c0_i32_0 : i32, i32, i32
  }
}

</mosaic_0001>

<llo_original>
// kernel: tpu_custom_call.1
$region0: #{tpu_custom_call.1}
  #allocation0 [shape = 'u32[]', space=smem, size = 0x4, offset = 0x4, fixed_abs, tag = 'smem constant byte address 0x4 - core index']
  #allocation1 [shape = 'u32[144,128]{1,0:T(1,128)}', space=vmem, size = 0x12000, scoped, tag = 'internal scratch']
  #allocation2 [shape = 'f32[8,64]{1,0:T(8,128)}', space=vmem, size = 0x1000, scoped, tag = 'scratch operand']
  #allocation3 [shape = 's32[1]{0}', space=sflag, size = 0x4, scoped, tag = 'scoped memory for tpu_custom_call.1']
  #allocation4 [shape = 'u8[512]{0}', space=smem, size = 0x200, scoped, tag = 'prefetched SMEM operand 0']
  %s0 = inlined_call_operand.vmem [shape: s32[2], index: 0, kind: input, shape index: {}]
  %s1 = inlined_call_operand.vmem [shape: f32[2,8,4], index: 1, kind: input, shape index: {}]
  %s2 = inlined_call_operand.vmem [shape: f32[8,64], index: 2, kind: input, shape index: {}]
  %s3 = inlined_call_operand.vmem [shape: f32[4,64], index: 3, kind: input, shape index: {}]
  %s4 = inlined_call_operand.hbm [shape: f32[2,32,96], index: 4, kind: input, shape index: {}]
  %s5 = inlined_call_operand.vmem [shape: f32[2,1,96], index: 5, kind: input, shape index: {}]
  %s6 = inlined_call_operand.hbm [shape: f32[2,32,32], index: 6, kind: input, shape index: {}]
  %s7 = inlined_call_operand.vmem [shape: f32[2,1,32], index: 7, kind: input, shape index: {}]
  %s8 = inlined_call_operand.hbm [shape: f32[2,1,64], index: 8, kind: output, shape index: {}]
  %s9 = sld [smem:[#allocation0]]
  $region69: #{tpu_custom_call.1} parent=0
    _
  %s11 = ssub.s32 1, %s9
  %s12 = scalar_select 0, %s11, %s9
  %s13 = sshll.u32 %s0, 4
  %s14 = int_to_ptr.vmem [resolvable:$true] %s13
  %16 = dma.vmem_to_smem %s14, 16, [#allocation4], [#allocation3]
  %17 = dma.done [#allocation3], 16
  %18 = sfence
  $region1: #{tpu_custom_call.1} parent=0
    #allocation5 [shape = 'u8[32768]{0}', space=vmem, size = 0x8000, scoped, tag = 'input window, operand 4, single buffered']
    #allocation6 [shape = 's32[2]{0}', space=sflag, size = 0x8, scoped, tag = 'scoped memory for tpu_custom_call.1']
    #allocation7 [shape = 's32[2]{0}', space=sflag, size = 0x8, scoped, tag = 'scoped memory for tpu_custom_call.1']
    #allocation8 [shape = 'u8[32768]{0}', space=vmem, size = 0x8000, scoped, tag = 'input window, operand 6, single buffered']
    #allocation9 [shape = 's32[1]{0}', space=sflag, size = 0x4, scoped, tag = 'scoped memory for tpu_custom_call.1']
    #allocation10 [shape = 'u8[1024]{0}', space=vmem, size = 0x400, scoped, tag = 'output window, operand 0']
    %19 = vsyncpa [#allocation6], 0
    %20 = vsyncpa [#allocation9], 0
    %21 = vsyncpa [#allocation7], 0
    %s22 = scalar_lea.sflag [#allocation7], 1
    %23 = vsyncpa %s22, 0
    loop: start=0, step=1, limit=4
    $region2: #{tpu_custom_call.1} parent=1 // loop_pre_header
      _
    $region3: #{tpu_custom_call.1} parent=1 // loop_header
      %s25 = sphi 0, %s29
      %p26 = scmp.ge.s32.totalorder %s25, 4
      %s35 = sphi 0, %s37
      %s38 = sphi 0, %s35
      %s39 = sphi 0, %s38
      %s55 = sphi 0, %s39
      %s59 = sphi 0, %s59
      %s61 = sphi 0, %s59
      %s62 = sphi 0, %s61
      %s76 = sphi 0, %s62
      %s80 = sphi 0, %s80
      %s82 = sphi 0, %s80
      %s83 = sphi 0, %s82
      %s97 = sphi 0, %s83
      %s101 = sphi 0, %s101
      %s103 = sphi 0, %s101
      %s104 = sphi 0, %s103
      %s118 = sphi 0, %s104
      %s122 = sphi 0, %s122
      %s124 = sphi 0, %s122
      %s125 = sphi 0, %s124
      %s139 = sphi 0, %s125
      %s143 = sphi 0, %s143
      %s145 = sphi 0, %s143
      %s146 = sphi 0, %s145
      %s160 = sphi 0, %s146
      %s164 = sphi 0, %s164
      %s166 = sphi 0, %s164
      %s167 = sphi 0, %s166
      %s181 = sphi 0, %s167
      %s187 = sphi 0, %s189
      %s190 = sphi 0, %s187
      %s191 = sphi 0, %s190
      %s207 = sphi 0, %s191
    $region4: #{tpu_custom_call.1} parent=1 // loop_header_branch
      %28 = sbr.rel (%p26) target = $region8
    $region5: #{tpu_custom_call.1} parent=1 // loop_body
      %s30 = ssub.s32 %s25, 1
      %s31 = ssub.s32 %s25, 2
      %s32 = sadd.s32 %s25, 1
      %s33 = ssub.s32 %s25, %s32
      %p34 = scmp.eq.s32.totalorder %s33, 0
      %s36 = sadd.s32 %s35, 1
      %s37 = scalar_select %p34, %s35, %s36
      %p40 = pneg %p34
      %p41 = scmp.eq.s32.totalorder %s25, 1
      %p42 = por %p40, %p41
      %p43 = scmp.ne.s32.totalorder %s35, %s38
      %p44 = scmp.eq.s32.totalorder %s25, 0
      %p45 = por %p43, %p44
      %p46 = scmp.ne.s32.totalorder %s35, %s38
      %p47 = scmp.eq.s32.totalorder %s30, 1
      %p48 = por %p46, %p47
      %p49 = scmp.ne.s32.totalorder %s38, %s39
      %p50 = scmp.eq.s32.totalorder %s30, 0
      %p51 = por %p49, %p50
      %p52 = scmp.ne.s32.totalorder %s38, %s39
      %p53 = scmp.eq.s32.totalorder %s31, 1
      %p54 = por %p52, %p53
      %p56 = scmp.ne.s32.totalorder %s39, %s55
      %p57 = scmp.eq.s32.totalorder %s31, 0
      %p58 = por %p56, %p57
      %s60 = sadd.s32 %s59, 1
      %p63 = scmp.eq.s32.totalorder %s25, 1
      %p64 = scmp.ne.s32.totalorder %s59, %s61
      %p65 = scmp.eq.s32.totalorder %s25, 0
      %p66 = por %p64, %p65
      %p67 = scmp.ne.s32.totalorder %s59, %s61
      %p68 = scmp.eq.s32.totalorder %s30, 1
      %p69 = por %p67, %p68
      %p70 = scmp.ne.s32.totalorder %s61, %s62
      %p71 = scmp.eq.s32.totalorder %s30, 0
      %p72 = por %p70, %p71
      %p73 = scmp.ne.s32.totalorder %s61, %s62
      %p74 = scmp.eq.s32.totalorder %s31, 1
      %p75 = por %p73, %p74
      %p77 = scmp.ne.s32.totalorder %s62, %s76
      %p78 = scmp.eq.s32.totalorder %s31, 0
      %p79 = por %p77, %p78
      %s81 = sadd.s32 %s80, 1
      %p84 = scmp.eq.s32.totalorder %s25, 1
      %p85 = scmp.ne.s32.totalorder %s80, %s82
      %p86 = scmp.eq.s32.totalorder %s25, 0
      %p87 = por %p85, %p86
      %p88 = scmp.ne.s32.totalorder %s80, %s82
      %p89 = scmp.eq.s32.totalorder %s30, 1
      %p90 = por %p88, %p89
      %p91 = scmp.ne.s32.totalorder %s82, %s83
      %p92 = scmp.eq.s32.totalorder %s30, 0
      %p93 = por %p91, %p92
      %p94 = scmp.ne.s32.totalorder %s82, %s83
      %p95 = scmp.eq.s32.totalorder %s31, 1
      %p96 = por %p94, %p95
      %p98 = scmp.ne.s32.totalorder %s83, %s97
      %p99 = scmp.eq.s32.totalorder %s31, 0
      %p100 = por %p98, %p99
      %s102 = sadd.s32 %s101, 1
      %p105 = scmp.eq.s32.totalorder %s25, 1
      %p106 = scmp.ne.s32.totalorder %s101, %s103
      %p107 = scmp.eq.s32.totalorder %s25, 0
      %p108 = por %p106, %p107
      %p109 = scmp.ne.s32.totalorder %s101, %s103
      %p110 = scmp.eq.s32.totalorder %s30, 1
      %p111 = por %p109, %p110
      %p112 = scmp.ne.s32.totalorder %s103, %s104
      %p113 = scmp.eq.s32.totalorder %s30, 0
      %p114 = por %p112, %p113
      %p115 = scmp.ne.s32.totalorder %s103, %s104
      %p116 = scmp.eq.s32.totalorder %s31, 1
      %p117 = por %p115, %p116
      %p119 = scmp.ne.s32.totalorder %s104, %s118
      %p120 = scmp.eq.s32.totalorder %s31, 0
      %p121 = por %p119, %p120
      %s123 = sadd.s32 %s122, 1
      %p126 = scmp.eq.s32.totalorder %s25, 1
      %p127 = scmp.ne.s32.totalorder %s122, %s124
      %p128 = scmp.eq.s32.totalorder %s25, 0
      %p129 = por %p127, %p128
      %p130 = scmp.ne.s32.totalorder %s122, %s124
      %p131 = scmp.eq.s32.totalorder %s30, 1
      %p132 = por %p130, %p131
      %p133 = scmp.ne.s32.totalorder %s124, %s125
      %p134 = scmp.eq.s32.totalorder %s30, 0
      %p135 = por %p133, %p134
      %p136 = scmp.ne.s32.totalorder %s124, %s125
      %p137 = scmp.eq.s32.totalorder %s31, 1
      %p138 = por %p136, %p137
      %p140 = scmp.ne.s32.totalorder %s125, %s139
      %p141 = scmp.eq.s32.totalorder %s31, 0
      %p142 = por %p140, %p141
      %s144 = sadd.s32 %s143, 1
      %p147 = scmp.eq.s32.totalorder %s25, 1
      %p148 = scmp.ne.s32.totalorder %s143, %s145
      %p149 = scmp.eq.s32.totalorder %s25, 0
      %p150 = por %p148, %p149
      %p151 = scmp.ne.s32.totalorder %s143, %s145
      %p152 = scmp.eq.s32.totalorder %s30, 1
      %p153 = por %p151, %p152
      %p154 = scmp.ne.s32.totalorder %s145, %s146
      %p155 = scmp.eq.s32.totalorder %s30, 0
      %p156 = por %p154, %p155
      %p157 = scmp.ne.s32.totalorder %s145, %s146
      %p158 = scmp.eq.s32.totalorder %s31, 1
      %p159 = por %p157, %p158
      %p161 = scmp.ne.s32.totalorder %s146, %s160
      %p162 = scmp.eq.s32.totalorder %s31, 0
      %p163 = por %p161, %p162
      %s165 = sadd.s32 %s164, 1
      %p168 = scmp.eq.s32.totalorder %s25, 1
      %p169 = scmp.ne.s32.totalorder %s164, %s166
      %p170 = scmp.eq.s32.totalorder %s25, 0
      %p171 = por %p169, %p170
      %p172 = scmp.ne.s32.totalorder %s164, %s166
      %p173 = scmp.eq.s32.totalorder %s30, 1
      %p174 = por %p172, %p173
      %p175 = scmp.ne.s32.totalorder %s166, %s167
      %p176 = scmp.eq.s32.totalorder %s30, 0
      %p177 = por %p175, %p176
      %p178 = scmp.ne.s32.totalorder %s166, %s167
      %p179 = scmp.eq.s32.totalorder %s31, 1
      %p180 = por %p178, %p179
      %p182 = scmp.ne.s32.totalorder %s167, %s181
      %p183 = scmp.eq.s32.totalorder %s31, 0
      %p184 = por %p182, %p183
      %s185 = ssub.s32 %s25, %s32
      %p186 = scmp.eq.s32.totalorder %s185, 0
      %s188 = sadd.s32 %s187, 1
      %s189 = scalar_select %p186, %s187, %s188
      %p192 = pneg %p186
      %p193 = scmp.eq.s32.totalorder %s25, 1
      %p194 = por %p192, %p193
      %p195 = scmp.ne.s32.totalorder %s187, %s190
      %p196 = scmp.eq.s32.totalorder %s25, 0
      %p197 = por %p195, %p196
      %p198 = scmp.ne.s32.totalorder %s187, %s190
      %p199 = scmp.eq.s32.totalorder %s30, 1
      %p200 = por %p198, %p199
      %p201 = scmp.ne.s32.totalorder %s190, %s191
      %p202 = scmp.eq.s32.totalorder %s30, 0
      %p203 = por %p201, %p202
      %p204 = scmp.ne.s32.totalorder %s190, %s191
      %p205 = scmp.eq.s32.totalorder %s31, 1
      %p206 = por %p204, %p205
      %p208 = scmp.ne.s32.totalorder %s191, %s207
      %p209 = scmp.eq.s32.totalorder %s31, 0
      %p210 = por %p208, %p209
      %p211 = scmp.le.s32.totalorder 1, %s25
      %p212 = scmp.lt.s32.totalorder %s25, 3
      %p213 = pnand %p211, %p212
      %p214 = pneg %p213
      // Predicated region
      $region9: #{tpu_custom_call.1} parent=5 // pred_check
        _
      $region10: #{tpu_custom_call.1} parent=5 // pred_check_branch
        %216 = sbr.rel (%p213) target = $region12
      $region11: #{tpu_custom_call.1} parent=5 // pred_region
        %s217 = ssub.s32 %s25, 1
        // Predicated region
        $region13: #{tpu_custom_call.1} parent=11 // pred_check
          %p218 = pneg %p72
        $region14: #{tpu_custom_call.1} parent=11 // pred_check_branch
          %220 = sbr.rel (%p218) target = $region16
        $region15: #{tpu_custom_call.1} parent=11 // pred_region
          _
        $region16: #{tpu_custom_call.1} parent=11 // pred_fallthru
          _
        // Predicated region
        $region17: #{tpu_custom_call.1} parent=11 // pred_check
          %p221 = pneg %p93
        $region18: #{tpu_custom_call.1} parent=11 // pred_check_branch
          %223 = sbr.rel (%p221) target = $region20
        $region19: #{tpu_custom_call.1} parent=11 // pred_region
          _
        $region20: #{tpu_custom_call.1} parent=11 // pred_fallthru
          _
        // Predicated region
        $region21: #{tpu_custom_call.1} parent=11 // pred_check
          %p224 = pneg %p114
        $region22: #{tpu_custom_call.1} parent=11 // pred_check_branch
          %226 = sbr.rel (%p224) target = $region24
        $region23: #{tpu_custom_call.1} parent=11 // pred_region
          %s228 = ssub.s32 1024, 1024
          %229 = vsyncadd [#allocation6], %s228
          %s230 = sshll.u32 [#allocation5], 4
          %s231 = int_to_ptr.vmem [resolvable:$true] %s230
          %236 = dma.hbm_to_vmem [thread:$0]  %s4, 1024, %s231, [#allocation6], 128, 128, 8
        $region24: #{tpu_custom_call.1} parent=11 // pred_fallthru
          _
        // Predicated region
        $region25: #{tpu_custom_call.1} parent=11 // pred_check
          %p237 = pneg %p135
        $region26: #{tpu_custom_call.1} parent=11 // pred_check_branch
          %239 = sbr.rel (%p237) target = $region28
        $region27: #{tpu_custom_call.1} parent=11 // pred_region
          _
        $region28: #{tpu_custom_call.1} parent=11 // pred_fallthru
          _
        // Predicated region
        $region29: #{tpu_custom_call.1} parent=11 // pred_check
          %p240 = pneg %p156
        $region30: #{tpu_custom_call.1} parent=11 // pred_check_branch
          %242 = sbr.rel (%p240) target = $region32
        $region31: #{tpu_custom_call.1} parent=11 // pred_region
          %s244 = ssub.s32 1024, 1024
          %245 = vsyncadd [#allocation9], %s244
          %s246 = sshll.u32 [#allocation8], 4
          %s247 = int_to_ptr.vmem [resolvable:$true] %s246
          %252 = dma.hbm_to_vmem [thread:$0]  %s6, 1024, %s247, [#allocation9], 128, 128, 8
        $region32: #{tpu_custom_call.1} parent=11 // pred_fallthru
          _
        // Predicated region
        $region33: #{tpu_custom_call.1} parent=11 // pred_check
          %p253 = pneg %p177
        $region34: #{tpu_custom_call.1} parent=11 // pred_check_branch
          %255 = sbr.rel (%p253) target = $region36
        $region35: #{tpu_custom_call.1} parent=11 // pred_region
          _
        $region36: #{tpu_custom_call.1} parent=11 // pred_fallthru
          _
      $region12: #{tpu_custom_call.1} parent=5 // pred_fallthru
        _
      %p256 = scmp.lt.s32.totalorder %s25, 2
      // Predicated region
      $region37: #{tpu_custom_call.1} parent=5 // pred_check
        %p257 = pneg %p256
      $region38: #{tpu_custom_call.1} parent=5 // pred_check_branch
        %259 = sbr.rel (%p257) target = $region40
      $region39: #{tpu_custom_call.1} parent=5 // pred_region
        // Predicated region
        $region41: #{tpu_custom_call.1} parent=39 // pred_check
          %p260 = pneg %p45
        $region42: #{tpu_custom_call.1} parent=39 // pred_check_branch
          %262 = sbr.rel (%p260) target = $region44
        $region43: #{tpu_custom_call.1} parent=39 // pred_region
          %p263 = scmp.lt.s32.totalorder %s25, 1
          %s264 = scalar_select %p263, %s25, 1
          %s265 = smul.addr %s264, 8
          %s266 = scalar_lea.vmem %s1, %s265
        $region44: #{tpu_custom_call.1} parent=39 // pred_fallthru
          _
      $region40: #{tpu_custom_call.1} parent=5 // pred_fallthru
        _
      %p267 = scmp.le.s32.totalorder 1, %s25
      %p268 = scmp.lt.s32.totalorder %s25, 3
      %p269 = pnand %p267, %p268
      %p270 = pneg %p269
      // Predicated region
      $region45: #{tpu_custom_call.1} parent=5 // pred_check
        _
      $region46: #{tpu_custom_call.1} parent=5 // pred_check_branch
        %272 = sbr.rel (%p269) target = $region48
      $region47: #{tpu_custom_call.1} parent=5 // pred_region
        %s273 = ssub.s32 %s25, 1
        // Predicated region
        $region49: #{tpu_custom_call.1} parent=47 // pred_check
          %p274 = pneg %p114
        $region50: #{tpu_custom_call.1} parent=47 // pred_check_branch
          %276 = sbr.rel (%p274) target = $region52
        $region51: #{tpu_custom_call.1} parent=47 // pred_region
          %277 = dma.done [#allocation6], 1024
        $region52: #{tpu_custom_call.1} parent=47 // pred_fallthru
          _
        // Predicated region
        $region53: #{tpu_custom_call.1} parent=47 // pred_check
          %p278 = pneg %p156
        $region54: #{tpu_custom_call.1} parent=47 // pred_check_branch
          %280 = sbr.rel (%p278) target = $region56
        $region55: #{tpu_custom_call.1} parent=47 // pred_region
          %281 = dma.done [#allocation9], 1024
        $region56: #{tpu_custom_call.1} parent=47 // pred_fallthru
          _
        %p282 = scmp.lt.s32.totalorder %s30, 1
        %s283 = scalar_select %p282, %s30, 1
        %s284 = smul.addr %s283, 8
        %s285 = scalar_lea.vmem %s1, %s284
        %p286 = pneg %p51
        %p287 = pneg %p48
        %p288 = pneg %p72
        %p289 = pneg %p69
        %p290 = pneg %p93
        %p291 = pneg %p90
        %p292 = pneg %p114
        %p293 = pneg %p111
        %p294 = pneg %p135
        %p295 = pneg %p132
        %p296 = pneg %p156
        %p297 = pneg %p153
        %p298 = pneg %p177
        %p299 = pneg %p174
        %p300 = pneg %p203
        %p301 = pneg %p200
        %s302 = sand.u32 %s190, 1
        %s303 = scalar_lea.sflag [#allocation7], %s302
        %s304 = sand.u32 %s190, 1
        %s305 = scalar_lea.vmem [#allocation10], %s304
        %p306 = scmp.lt.s32.totalorder %s30, 1
        %s307 = scalar_select %p306, %s30, 1
        %s308 = smul.addr %s307, 8
        %s309 = scalar_lea.vmem %s1, %s308
        %v310 = vld [vmem:[%s309] sm:$0xff]
        %v311 = vld [vmem:[%s3] sm:$0xf]
        %v312 = vld [vmem:[%s2] sm:$0xff]
        %vm313 = vcmask 31744
        %v315 = vsel %vm313, %v310, 0
        %vm317 = vcmask 1043456
        %v319 = vsel %vm317, %v311, 0
        %321 = vmatprep.subr.mxu0 0.0
        %322 = vmatpush1.msra.mxu0 0.0
        %323 = vmatprep.subr.mxu0 0.0
        %324 = vmatpush1.msra.mxu0 0.0
        %325 = vmatprep.subr.mxu0 0.0
        %326 = vmatpush1.msra.mxu0 0.0
        %327 = vmatprep.subr.mxu0 0.0
        %328 = vmatpush1.msra.mxu0 0.0
        %329 = vmatprep.subr.mxu0 0.0
        %330 = vmatpush1.msra.mxu0 0.0
        %331 = vmatprep.subr.mxu0 0.0
        %332 = vmatpush1.msra.mxu0 0.0
        %333 = vmatprep.subr.mxu0 0.0
        %334 = vmatpush1.msra.mxu0 0.0
        %335 = vmatprep.subr.mxu0 0.0
        %336 = vmatpush1.msra.mxu0 0.0
        %337 = vmatprep.subr.mxu0 0.0
        %338 = vmatpush1.msra.mxu0 0.0
        %339 = vmatprep.subr.mxu0 0.0
        %340 = vmatpush1.msra.mxu0 0.0
        %341 = vmatprep.subr.mxu0 0.0
        %342 = vmatpush1.msra.mxu0 0.0
        %343 = vmatprep.subr.mxu0 0.0
        %344 = vmatpush1.msra.mxu0 0.0
        %345 = vmatprep.subr.mxu0 0.0
        %346 = vmatpush1.msra.mxu0 0.0
        %347 = vmatprep.subr.mxu0 0.0
        %348 = vmatpush1.msra.mxu0 0.0
        %349 = vmatprep.subr.mxu0 0.0
        %350 = vmatpush1.msra.mxu0 0.0
        %351 = vmatprep.subr.mxu0 0.0
        %352 = vmatpush1.msra.mxu0 %v319
        %353 = vmatprep.subr.mxu0 0.0
        %354 = vmatpush2.msra.mxu0 0.0
        %355 = vmatprep.subr.mxu0 0.0
        %356 = vmatpush2.msra.mxu0 0.0
        %357 = vmatprep.subr.mxu0 0.0
        %358 = vmatpush2.msra.mxu0 0.0
        %359 = vmatprep.subr.mxu0 0.0
        %360 = vmatpush2.msra.mxu0 0.0
        %361 = vmatprep.subr.mxu0 0.0
        %362 = vmatpush2.msra.mxu0 0.0
        %363 = vmatprep.subr.mxu0 0.0
        %364 = vmatpush2.msra.mxu0 0.0
        %365 = vmatprep.subr.mxu0 0.0
        %366 = vmatpush2.msra.mxu0 0.0
        %367 = vmatprep.subr.mxu0 0.0
        %368 = vmatpush2.msra.mxu0 0.0
        %369 = vmatprep.subr.mxu0 0.0
        %370 = vmatpush2.msra.mxu0 0.0
        %371 = vmatprep.subr.mxu0 0.0
        %372 = vmatpush2.msra.mxu0 0.0
        %373 = vmatprep.subr.mxu0 0.0
        %374 = vmatpush2.msra.mxu0 0.0
        %375 = vmatprep.subr.mxu0 0.0
        %376 = vmatpush2.msra.mxu0 0.0
        %377 = vmatprep.subr.mxu0 0.0
        %378 = vmatpush2.msra.mxu0 0.0
        %379 = vmatprep.subr.mxu0 0.0
        %380 = vmatpush2.msra.mxu0 0.0
        %381 = vmatprep.subr.mxu0 0.0
        %382 = vmatpush2.msra.mxu0 0.0
        %383 = vmatprep.subr.mxu0 0.0
        %384 = vmatpush2.msra.mxu0 0.0
        %385 = vmatprep.mubr.f32.mxu0 0.0
        %386 = vmatmul.mubr.f32.gmra.mxu0 %v315
        %v387 = vpop.f32.mrf.mxu0
        %v388 = vadd.f32 %v312, %v387
        %v389 = vpop.f32.mrf.mxu0
        %390 = vdwg.mxu0
        %v391 = vmax.f32 %v388, 0.0
        %v392 = vld [vmem:[#allocation5] sm:$0xff]
        %v393 = vld [vmem:[#allocation5 + $0x8] sm:$0xff]
        %v394 = vld [vmem:[#allocation5 + $0x10] sm:$0xff]
        %v395 = vld [vmem:[#allocation5 + $0x18] sm:$0xff]
        %v396 = vld [vmem:[%s5] sm:$0x1]
        %v397 = vld [vmem:[#allocation8] sm:$0xff]
        %v398 = vld [vmem:[#allocation8 + $0x8] sm:$0xff]
        %v399 = vld [vmem:[#allocation8 + $0x10] sm:$0xff]
        %v400 = vld [vmem:[#allocation8 + $0x18] sm:$0xff]
        %v401 = vld [vmem:[%s7] sm:$0x1]
        %v403 = vlaneseq
        %v404 = vshrl.u32 %v403, 7
        %v405 = vsub.s32 0, %v404
        %v406 = vrot.slane %v396, %v405
        %vm408 = vcmask 261120
        %v410 = vsel %vm408, %v391, 0
        %412 = vmatprep.subr.mxu0 0.0
        %413 = vmatpush1.msra.mxu0 0.0
        %414 = vmatprep.subr.mxu0 0.0
        %415 = vmatpush1.msra.mxu0 0.0
        %416 = vmatprep.subr.mxu0 0.0
        %417 = vmatpush1.msra.mxu0 0.0
        %418 = vmatprep.subr.mxu0 0.0
        %419 = vmatpush1.msra.mxu0 0.0
        %420 = vmatprep.subr.mxu0 0.0
        %421 = vmatpush1.msra.mxu0 0.0
        %422 = vmatprep.subr.mxu0 0.0
        %423 = vmatpush1.msra.mxu0 0.0
        %424 = vmatprep.subr.mxu0 0.0
        %425 = vmatpush1.msra.mxu0 0.0
        %426 = vmatprep.subr.mxu0 0.0
        %427 = vmatpush1.msra.mxu0 0.0
        %428 = vmatprep.subr.mxu0 0.0
        %429 = vmatpush1.msra.mxu0 0.0
        %430 = vmatprep.subr.mxu0 0.0
        %431 = vmatpush1.msra.mxu0 0.0
        %432 = vmatprep.subr.mxu0 0.0
        %433 = vmatpush1.msra.mxu0 0.0
        %434 = vmatprep.subr.mxu0 0.0
        %435 = vmatpush1.msra.mxu0 0.0
        %436 = vmatprep.subr.mxu0 0.0
        %437 = vmatpush1.msra.mxu0 %v395
        %438 = vmatprep.subr.mxu0 0.0
        %439 = vmatpush1.msra.mxu0 %v394
        %440 = vmatprep.subr.mxu0 0.0
        %441 = vmatpush1.msra.mxu0 %v393
        %442 = vmatprep.subr.mxu0 0.0
        %443 = vmatpush1.msra.mxu0 %v392
        %444 = vmatprep.subr.mxu0 0.0
        %445 = vmatpush2.msra.mxu0 0.0
        %446 = vmatprep.subr.mxu0 0.0
        %447 = vmatpush2.msra.mxu0 0.0
        %448 = vmatprep.subr.mxu0 0.0
        %449 = vmatpush2.msra.mxu0 0.0
        %450 = vmatprep.subr.mxu0 0.0
        %451 = vmatpush2.msra.mxu0 0.0
        %452 = vmatprep.subr.mxu0 0.0
        %453 = vmatpush2.msra.mxu0 0.0
        %454 = vmatprep.subr.mxu0 0.0
        %455 = vmatpush2.msra.mxu0 0.0
        %456 = vmatprep.subr.mxu0 0.0
        %457 = vmatpush2.msra.mxu0 0.0
        %458 = vmatprep.subr.mxu0 0.0
        %459 = vmatpush2.msra.mxu0 0.0
        %460 = vmatprep.subr.mxu0 0.0
        %461 = vmatpush2.msra.mxu0 0.0
        %462 = vmatprep.subr.mxu0 0.0
        %463 = vmatpush2.msra.mxu0 0.0
        %464 = vmatprep.subr.mxu0 0.0
        %465 = vmatpush2.msra.mxu0 0.0
        %466 = vmatprep.subr.mxu0 0.0
        %467 = vmatpush2.msra.mxu0 0.0
        %468 = vmatprep.subr.mxu0 0.0
        %469 = vmatpush2.msra.mxu0 0.0
        %470 = vmatprep.subr.mxu0 0.0
        %471 = vmatpush2.msra.mxu0 0.0
        %472 = vmatprep.subr.mxu0 0.0
        %473 = vmatpush2.msra.mxu0 0.0
        %474 = vmatprep.subr.mxu0 0.0
        %475 = vmatpush2.msra.mxu0 0.0
        %476 = vmatprep.mubr.f32.mxu0 0.0
        %477 = vmatmul.mubr.f32.gmra.mxu0 %v410
        %v478 = vpop.f32.mrf.mxu0
        %v479 = vadd.f32 %v406, %v478
        %v480 = vpop.f32.mrf.mxu0
        %481 = vdwg.mxu0
        %v482 = vtanh.pop %v479
        %484 = vrot.lane.b32.xlu0 %v482, 96
        %v485 = vpop.permute.xlu0 %484
        %v486 = vsel %vm408, %v482, 0
        %v488 = vsel %vm408, %v485, 0
        %490 = vmatprep.subr.mxu0 0.0
        %491 = vmatpush1.xpose.msra.mxu0 0.0
        %492 = vmatprep.subr.mxu0 0.0
        %493 = vmatpush1.xpose.msra.mxu0 0.0
        %494 = vmatprep.subr.mxu0 0.0
        %495 = vmatpush1.xpose.msra.mxu0 0.0
        %496 = vmatprep.subr.mxu0 0.0
        %497 = vmatpush1.xpose.msra.mxu0 0.0
        %498 = vmatprep.subr.mxu0 0.0
        %499 = vmatpush1.xpose.msra.mxu0 0.0
        %500 = vmatprep.subr.mxu0 0.0
        %501 = vmatpush1.xpose.msra.mxu0 0.0
        %502 = vmatprep.subr.mxu0 0.0
        %503 = vmatpush1.xpose.msra.mxu0 0.0
        %504 = vmatprep.subr.mxu0 0.0
        %505 = vmatpush1.xpose.msra.mxu0 0.0
        %506 = vmatprep.subr.mxu0 0.0
        %507 = vmatpush1.xpose.msra.mxu0 0.0
        %508 = vmatprep.subr.mxu0 0.0
        %509 = vmatpush1.xpose.msra.mxu0 0.0
        %510 = vmatprep.subr.mxu0 0.0
        %511 = vmatpush1.xpose.msra.mxu0 0.0
        %512 = vmatprep.subr.mxu0 0.0
        %513 = vmatpush1.xpose.msra.mxu0 0.0
        %514 = vmatprep.subr.mxu0 0.0
        %515 = vmatpush1.xpose.msra.mxu0 0.0
        %516 = vmatprep.subr.mxu0 0.0
        %517 = vmatpush1.xpose.msra.mxu0 0.0
        %518 = vmatprep.subr.mxu0 0.0
        %519 = vmatpush1.xpose.msra.mxu0 0.0
        %520 = vmatprep.subr.mxu0 0.0
        %521 = vmatpush1.xpose.msra.mxu0 %v488
        %522 = vmatprep.subr.mxu0 0.0
        %523 = vmatpush2.xpose.msra.mxu0 0.0
        %524 = vmatprep.subr.mxu0 0.0
        %525 = vmatpush2.xpose.msra.mxu0 0.0
        %526 = vmatprep.subr.mxu0 0.0
        %527 = vmatpush2.xpose.msra.mxu0 0.0
        %528 = vmatprep.subr.mxu0 0.0
        %529 = vmatpush2.xpose.msra.mxu0 0.0
        %530 = vmatprep.subr.mxu0 0.0
        %531 = vmatpush2.xpose.msra.mxu0 0.0
        %532 = vmatprep.subr.mxu0 0.0
        %533 = vmatpush2.xpose.msra.mxu0 0.0
        %534 = vmatprep.subr.mxu0 0.0
        %535 = vmatpush2.xpose.msra.mxu0 0.0
        %536 = vmatprep.subr.mxu0 0.0
        %537 = vmatpush2.xpose.msra.mxu0 0.0
        %538 = vmatprep.subr.mxu0 0.0
        %539 = vmatpush2.xpose.msra.mxu0 0.0
        %540 = vmatprep.subr.mxu0 0.0
        %541 = vmatpush2.xpose.msra.mxu0 0.0
        %542 = vmatprep.subr.mxu0 0.0
        %543 = vmatpush2.xpose.msra.mxu0 0.0
        %544 = vmatprep.subr.mxu0 0.0
        %545 = vmatpush2.xpose.msra.mxu0 0.0
        %546 = vmatprep.subr.mxu0 0.0
        %547 = vmatpush2.xpose.msra.mxu0 0.0
        %548 = vmatprep.subr.mxu0 0.0
        %549 = vmatpush2.xpose.msra.mxu0 0.0
        %550 = vmatprep.subr.mxu0 0.0
        %551 = vmatpush2.xpose.msra.mxu0 0.0
        %552 = vmatprep.subr.mxu0 0.0
        %553 = vmatpush2.xpose.msra.mxu0 0.0
        %554 = vmatprep.mubr.f32.mxu0 0.0
        %555 = vmatmul.mubr.f32.gmra.mxu0 %v486
        %v556 = vpop.f32.mrf.mxu0
        %v557 = vadd.f32 0.0, %v556
        %v558 = vpop.f32.mrf.mxu0
        %559 = vdwg.mxu0
        %vm560 = vcmask 64512
        %v561 = vsel %vm560, %v557, -inf
        %562 = vmax.xlane.f32.xlu0 %v561
        %v563 = vpop.xlane.xlu0 %562
        %v564 = vsub.f32 %v557, %v563
        %v565 = vmul.f32 %v564, 1.442695
        %v566 = vpow.pop %v565
        %v567 = vsel %vm560, %v566, 0.0
        %568 = vadd.xlane.f32.xlu0 %v567
        %v569 = vpop.xlane.xlu0 %568
        %v570 = vrcp.pop %v569
        %v571 = vmul.f32 %v566, %v570
        %572 = vrot.lane.b32.xlu0 %v482, 64
        %v573 = vpop.permute.xlu0 %572
        %v576 = vsel %vm560, %v571, 0
        %578 = vmatprep.subr.mxu0 0.0
        %579 = vmatpush1.msra.mxu0 0.0
        %580 = vmatprep.subr.mxu0 0.0
        %581 = vmatpush1.msra.mxu0 0.0
        %582 = vmatprep.subr.mxu0 0.0
        %583 = vmatpush1.msra.mxu0 0.0
        %584 = vmatprep.subr.mxu0 0.0
        %585 = vmatpush1.msra.mxu0 0.0
        %586 = vmatprep.subr.mxu0 0.0
        %587 = vmatpush1.msra.mxu0 0.0
        %588 = vmatprep.subr.mxu0 0.0
        %589 = vmatpush1.msra.mxu0 0.0
        %590 = vmatprep.subr.mxu0 0.0
        %591 = vmatpush1.msra.mxu0 0.0
        %592 = vmatprep.subr.mxu0 0.0
        %593 = vmatpush1.msra.mxu0 0.0
        %594 = vmatprep.subr.mxu0 0.0
        %595 = vmatpush1.msra.mxu0 0.0
        %596 = vmatprep.subr.mxu0 0.0
        %597 = vmatpush1.msra.mxu0 0.0
        %598 = vmatprep.subr.mxu0 0.0
        %599 = vmatpush1.msra.mxu0 0.0
        %600 = vmatprep.subr.mxu0 0.0
        %601 = vmatpush1.msra.mxu0 0.0
        %602 = vmatprep.subr.mxu0 0.0
        %603 = vmatpush1.msra.mxu0 0.0
        %604 = vmatprep.subr.mxu0 0.0
        %605 = vmatpush1.msra.mxu0 0.0
        %606 = vmatprep.subr.mxu0 0.0
        %607 = vmatpush1.msra.mxu0 0.0
        %608 = vmatprep.subr.mxu0 0.0
        %609 = vmatpush1.msra.mxu0 %v573
        %610 = vmatprep.subr.mxu0 0.0
        %611 = vmatpush2.msra.mxu0 0.0
        %612 = vmatprep.subr.mxu0 0.0
        %613 = vmatpush2.msra.mxu0 0.0
        %614 = vmatprep.subr.mxu0 0.0
        %615 = vmatpush2.msra.mxu0 0.0
        %616 = vmatprep.subr.mxu0 0.0
        %617 = vmatpush2.msra.mxu0 0.0
        %618 = vmatprep.subr.mxu0 0.0
        %619 = vmatpush2.msra.mxu0 0.0
        %620 = vmatprep.subr.mxu0 0.0
        %621 = vmatpush2.msra.mxu0 0.0
        %622 = vmatprep.subr.mxu0 0.0
        %623 = vmatpush2.msra.mxu0 0.0
        %624 = vmatprep.subr.mxu0 0.0
        %625 = vmatpush2.msra.mxu0 0.0
        %626 = vmatprep.subr.mxu0 0.0
        %627 = vmatpush2.msra.mxu0 0.0
        %628 = vmatprep.subr.mxu0 0.0
        %629 = vmatpush2.msra.mxu0 0.0
        %630 = vmatprep.subr.mxu0 0.0
        %631 = vmatpush2.msra.mxu0 0.0
        %632 = vmatprep.subr.mxu0 0.0
        %633 = vmatpush2.msra.mxu0 0.0
        %634 = vmatprep.subr.mxu0 0.0
        %635 = vmatpush2.msra.mxu0 0.0
        %636 = vmatprep.subr.mxu0 0.0
        %637 = vmatpush2.msra.mxu0 0.0
        %638 = vmatprep.subr.mxu0 0.0
        %639 = vmatpush2.msra.mxu0 0.0
        %640 = vmatprep.subr.mxu0 0.0
        %641 = vmatpush2.msra.mxu0 0.0
        %642 = vmatprep.mubr.f32.mxu0 0.0
        %643 = vmatmul.mubr.f32.gmra.mxu0 %v576
        %v644 = vpop.f32.mrf.mxu0
        %v645 = vadd.f32 0.0, %v644
        %v646 = vpop.f32.mrf.mxu0
        %647 = vdwg.mxu0
        %v649 = vlaneseq
        %v650 = vshrl.u32 %v649, 7
        %v651 = vsub.s32 0, %v650
        %v652 = vrot.slane %v401, %v651
        %v655 = vsel %vm408, %v645, 0
        %657 = vmatprep.subr.mxu0 0.0
        %658 = vmatpush1.msra.mxu0 0.0
        %659 = vmatprep.subr.mxu0 0.0
        %660 = vmatpush1.msra.mxu0 0.0
        %661 = vmatprep.subr.mxu0 0.0
        %662 = vmatpush1.msra.mxu0 0.0
        %663 = vmatprep.subr.mxu0 0.0
        %664 = vmatpush1.msra.mxu0 0.0
        %665 = vmatprep.subr.mxu0 0.0
        %666 = vmatpush1.msra.mxu0 0.0
        %667 = vmatprep.subr.mxu0 0.0
        %668 = vmatpush1.msra.mxu0 0.0
        %669 = vmatprep.subr.mxu0 0.0
        %670 = vmatpush1.msra.mxu0 0.0
        %671 = vmatprep.subr.mxu0 0.0
        %672 = vmatpush1.msra.mxu0 0.0
        %673 = vmatprep.subr.mxu0 0.0
        %674 = vmatpush1.msra.mxu0 0.0
        %675 = vmatprep.subr.mxu0 0.0
        %676 = vmatpush1.msra.mxu0 0.0
        %677 = vmatprep.subr.mxu0 0.0
        %678 = vmatpush1.msra.mxu0 0.0
        %679 = vmatprep.subr.mxu0 0.0
        %680 = vmatpush1.msra.mxu0 0.0
        %681 = vmatprep.subr.mxu0 0.0
        %682 = vmatpush1.msra.mxu0 %v400
        %683 = vmatprep.subr.mxu0 0.0
        %684 = vmatpush1.msra.mxu0 %v399
        %685 = vmatprep.subr.mxu0 0.0
        %686 = vmatpush1.msra.mxu0 %v398
        %687 = vmatprep.subr.mxu0 0.0
        %688 = vmatpush1.msra.mxu0 %v397
        %689 = vmatprep.subr.mxu0 0.0
        %690 = vmatpush2.msra.mxu0 0.0
        %691 = vmatprep.subr.mxu0 0.0
        %692 = vmatpush2.msra.mxu0 0.0
        %693 = vmatprep.subr.mxu0 0.0
        %694 = vmatpush2.msra.mxu0 0.0
        %695 = vmatprep.subr.mxu0 0.0
        %696 = vmatpush2.msra.mxu0 0.0
        %697 = vmatprep.subr.mxu0 0.0
        %698 = vmatpush2.msra.mxu0 0.0
        %699 = vmatprep.subr.mxu0 0.0
        %700 = vmatpush2.msra.mxu0 0.0
        %701 = vmatprep.subr.mxu0 0.0
        %702 = vmatpush2.msra.mxu0 0.0
        %703 = vmatprep.subr.mxu0 0.0
        %704 = vmatpush2.msra.mxu0 0.0
        %705 = vmatprep.subr.mxu0 0.0
        %706 = vmatpush2.msra.mxu0 0.0
        %707 = vmatprep.subr.mxu0 0.0
        %708 = vmatpush2.msra.mxu0 0.0
        %709 = vmatprep.subr.mxu0 0.0
        %710 = vmatpush2.msra.mxu0 0.0
        %711 = vmatprep.subr.mxu0 0.0
        %712 = vmatpush2.msra.mxu0 0.0
        %713 = vmatprep.subr.mxu0 0.0
        %714 = vmatpush2.msra.mxu0 0.0
        %715 = vmatprep.subr.mxu0 0.0
        %716 = vmatpush2.msra.mxu0 0.0
        %717 = vmatprep.subr.mxu0 0.0
        %718 = vmatpush2.msra.mxu0 0.0
        %719 = vmatprep.subr.mxu0 0.0
        %720 = vmatpush2.msra.mxu0 0.0
        %721 = vmatprep.mubr.f32.mxu0 0.0
        %722 = vmatmul.mubr.f32.gmra.mxu0 %v655
        %v723 = vpop.f32.mrf.mxu0
        %v724 = vadd.f32 %v652, %v723
        %v725 = vpop.f32.mrf.mxu0
        %726 = vdwg.mxu0
        %v727 = vmax.f32 %v724, 0.0
        %728 = vst.msk [vmem:[#allocation2] sm:$0xff] %vm408, %v727
        %s729 = scalar_lea.vmem [#allocation5], 32
        %v730 = vld [vmem:[%s729] sm:$0xff]
        %v731 = vld [vmem:[%s729 + $0x8] sm:$0xff]
        %v732 = vld [vmem:[%s729 + $0x10] sm:$0xff]
        %v733 = vld [vmem:[%s729 + $0x18] sm:$0xff]
        %s734 = scalar_lea.vmem %s5, 1
        %v735 = vld [vmem:[%s734] sm:$0x1]
        %s736 = scalar_lea.vmem [#allocation8], 32
        %v737 = vld [vmem:[%s736] sm:$0xff]
        %v738 = vld [vmem:[%s736 + $0x8] sm:$0xff]
        %v739 = vld [vmem:[%s736 + $0x10] sm:$0xff]
        %v740 = vld [vmem:[%s736 + $0x18] sm:$0xff]
        %s741 = scalar_lea.vmem %s7, 1
        %v742 = vld [vmem:[%s741] sm:$0x1]
        %v744 = vlaneseq
        %v745 = vshrl.u32 %v744, 7
        %v746 = vsub.s32 0, %v745
        %v747 = vrot.slane %v735, %v746
        %749 = vrot.lane.b32.xlu0 %v391, 96
        %v750 = vpop.permute.xlu0 %749
        %v751 = vsel %vm408, %v750, 0
        %753 = vmatprep.subr.mxu0 0.0
        %754 = vmatpush1.msra.mxu0 0.0
        %755 = vmatprep.subr.mxu0 0.0
        %756 = vmatpush1.msra.mxu0 0.0
        %757 = vmatprep.subr.mxu0 0.0
        %758 = vmatpush1.msra.mxu0 0.0
        %759 = vmatprep.subr.mxu0 0.0
        %760 = vmatpush1.msra.mxu0 0.0
        %761 = vmatprep.subr.mxu0 0.0
        %762 = vmatpush1.msra.mxu0 0.0
        %763 = vmatprep.subr.mxu0 0.0
        %764 = vmatpush1.msra.mxu0 0.0
        %765 = vmatprep.subr.mxu0 0.0
        %766 = vmatpush1.msra.mxu0 0.0
        %767 = vmatprep.subr.mxu0 0.0
        %768 = vmatpush1.msra.mxu0 0.0
        %769 = vmatprep.subr.mxu0 0.0
        %770 = vmatpush1.msra.mxu0 0.0
        %771 = vmatprep.subr.mxu0 0.0
        %772 = vmatpush1.msra.mxu0 0.0
        %773 = vmatprep.subr.mxu0 0.0
        %774 = vmatpush1.msra.mxu0 0.0
        %775 = vmatprep.subr.mxu0 0.0
        %776 = vmatpush1.msra.mxu0 0.0
        %777 = vmatprep.subr.mxu0 0.0
        %778 = vmatpush1.msra.mxu0 %v733
        %779 = vmatprep.subr.mxu0 0.0
        %780 = vmatpush1.msra.mxu0 %v732
        %781 = vmatprep.subr.mxu0 0.0
        %782 = vmatpush1.msra.mxu0 %v731
        %783 = vmatprep.subr.mxu0 0.0
        %784 = vmatpush1.msra.mxu0 %v730
        %785 = vmatprep.subr.mxu0 0.0
        %786 = vmatpush2.msra.mxu0 0.0
        %787 = vmatprep.subr.mxu0 0.0
        %788 = vmatpush2.msra.mxu0 0.0
        %789 = vmatprep.subr.mxu0 0.0
        %790 = vmatpush2.msra.mxu0 0.0
        %791 = vmatprep.subr.mxu0 0.0
        %792 = vmatpush2.msra.mxu0 0.0
        %793 = vmatprep.subr.mxu0 0.0
        %794 = vmatpush2.msra.mxu0 0.0
        %795 = vmatprep.subr.mxu0 0.0
        %796 = vmatpush2.msra.mxu0 0.0
        %797 = vmatprep.subr.mxu0 0.0
        %798 = vmatpush2.msra.mxu0 0.0
        %799 = vmatprep.subr.mxu0 0.0
        %800 = vmatpush2.msra.mxu0 0.0
        %801 = vmatprep.subr.mxu0 0.0
        %802 = vmatpush2.msra.mxu0 0.0
        %803 = vmatprep.subr.mxu0 0.0
        %804 = vmatpush2.msra.mxu0 0.0
        %805 = vmatprep.subr.mxu0 0.0
        %806 = vmatpush2.msra.mxu0 0.0
        %807 = vmatprep.subr.mxu0 0.0
        %808 = vmatpush2.msra.mxu0 0.0
        %809 = vmatprep.subr.mxu0 0.0
        %810 = vmatpush2.msra.mxu0 0.0
        %811 = vmatprep.subr.mxu0 0.0
        %812 = vmatpush2.msra.mxu0 0.0
        %813 = vmatprep.subr.mxu0 0.0
        %814 = vmatpush2.msra.mxu0 0.0
        %815 = vmatprep.subr.mxu0 0.0
        %816 = vmatpush2.msra.mxu0 0.0
        %817 = vmatprep.mubr.f32.mxu0 0.0
        %818 = vmatmul.mubr.f32.gmra.mxu0 %v751
        %v819 = vpop.f32.mrf.mxu0
        %v820 = vadd.f32 %v747, %v819
        %v821 = vpop.f32.mrf.mxu0
        %822 = vdwg.mxu0
        %v823 = vtanh.pop %v820
        %825 = vrot.lane.b32.xlu0 %v823, 96
        %v826 = vpop.permute.xlu0 %825
        %v827 = vsel %vm408, %v823, 0
        %v829 = vsel %vm408, %v826, 0
        %831 = vmatprep.subr.mxu0 0.0
        %832 = vmatpush1.xpose.msra.mxu0 0.0
        %833 = vmatprep.subr.mxu0 0.0
        %834 = vmatpush1.xpose.msra.mxu0 0.0
        %835 = vmatprep.subr.mxu0 0.0
        %836 = vmatpush1.xpose.msra.mxu0 0.0
        %837 = vmatprep.subr.mxu0 0.0
        %838 = vmatpush1.xpose.msra.mxu0 0.0
        %839 = vmatprep.subr.mxu0 0.0
        %840 = vmatpush1.xpose.msra.mxu0 0.0
        %841 = vmatprep.subr.mxu0 0.0
        %842 = vmatpush1.xpose.msra.mxu0 0.0
        %843 = vmatprep.subr.mxu0 0.0
        %844 = vmatpush1.xpose.msra.mxu0 0.0
        %845 = vmatprep.subr.mxu0 0.0
        %846 = vmatpush1.xpose.msra.mxu0 0.0
        %847 = vmatprep.subr.mxu0 0.0
        %848 = vmatpush1.xpose.msra.mxu0 0.0
        %849 = vmatprep.subr.mxu0 0.0
        %850 = vmatpush1.xpose.msra.mxu0 0.0
        %851 = vmatprep.subr.mxu0 0.0
        %852 = vmatpush1.xpose.msra.mxu0 0.0
        %853 = vmatprep.subr.mxu0 0.0
        %854 = vmatpush1.xpose.msra.mxu0 0.0
        %855 = vmatprep.subr.mxu0 0.0
        %856 = vmatpush1.xpose.msra.mxu0 0.0
        %857 = vmatprep.subr.mxu0 0.0
        %858 = vmatpush1.xpose.msra.mxu0 0.0
        %859 = vmatprep.subr.mxu0 0.0
        %860 = vmatpush1.xpose.msra.mxu0 0.0
        %861 = vmatprep.subr.mxu0 0.0
        %862 = vmatpush1.xpose.msra.mxu0 %v829
        %863 = vmatprep.subr.mxu0 0.0
        %864 = vmatpush2.xpose.msra.mxu0 0.0
        %865 = vmatprep.subr.mxu0 0.0
        %866 = vmatpush2.xpose.msra.mxu0 0.0
        %867 = vmatprep.subr.mxu0 0.0
        %868 = vmatpush2.xpose.msra.mxu0 0.0
        %869 = vmatprep.subr.mxu0 0.0
        %870 = vmatpush2.xpose.msra.mxu0 0.0
        %871 = vmatprep.subr.mxu0 0.0
        %872 = vmatpush2.xpose.msra.mxu0 0.0
        %873 = vmatprep.subr.mxu0 0.0
        %874 = vmatpush2.xpose.msra.mxu0 0.0
        %875 = vmatprep.subr.mxu0 0.0
        %876 = vmatpush2.xpose.msra.mxu0 0.0
        %877 = vmatprep.subr.mxu0 0.0
        %878 = vmatpush2.xpose.msra.mxu0 0.0
        %879 = vmatprep.subr.mxu0 0.0
        %880 = vmatpush2.xpose.msra.mxu0 0.0
        %881 = vmatprep.subr.mxu0 0.0
        %882 = vmatpush2.xpose.msra.mxu0 0.0
        %883 = vmatprep.subr.mxu0 0.0
        %884 = vmatpush2.xpose.msra.mxu0 0.0
        %885 = vmatprep.subr.mxu0 0.0
        %886 = vmatpush2.xpose.msra.mxu0 0.0
        %887 = vmatprep.subr.mxu0 0.0
        %888 = vmatpush2.xpose.msra.mxu0 0.0
        %889 = vmatprep.subr.mxu0 0.0
        %890 = vmatpush2.xpose.msra.mxu0 0.0
        %891 = vmatprep.subr.mxu0 0.0
        %892 = vmatpush2.xpose.msra.mxu0 0.0
        %893 = vmatprep.subr.mxu0 0.0
        %894 = vmatpush2.xpose.msra.mxu0 0.0
        %895 = vmatprep.mubr.f32.mxu0 0.0
        %896 = vmatmul.mubr.f32.gmra.mxu0 %v827
        %v897 = vpop.f32.mrf.mxu0
        %v898 = vadd.f32 0.0, %v897
        %v899 = vpop.f32.mrf.mxu0
        %900 = vdwg.mxu0
        %v901 = vsel %vm560, %v898, -inf
        %902 = vmax.xlane.f32.xlu0 %v901
        %v903 = vpop.xlane.xlu0 %902
        %v904 = vsub.f32 %v898, %v903
        %v905 = vmul.f32 %v904, 1.442695
        %v906 = vpow.pop %v905
        %v907 = vsel %vm560, %v906, 0.0
        %908 = vadd.xlane.f32.xlu0 %v907
        %v909 = vpop.xlane.xlu0 %908
        %v910 = vrcp.pop %v909
        %v911 = vmul.f32 %v906, %v910
        %912 = vrot.lane.b32.xlu0 %v823, 64
        %v913 = vpop.permute.xlu0 %912
        %v916 = vsel %vm560, %v911, 0
        %918 = vmatprep.subr.mxu0 0.0
        %919 = vmatpush1.msra.mxu0 0.0
        %920 = vmatprep.subr.mxu0 0.0
        %921 = vmatpush1.msra.mxu0 0.0
        %922 = vmatprep.subr.mxu0 0.0
        %923 = vmatpush1.msra.mxu0 0.0
        %924 = vmatprep.subr.mxu0 0.0
        %925 = vmatpush1.msra.mxu0 0.0
        %926 = vmatprep.subr.mxu0 0.0
        %927 = vmatpush1.msra.mxu0 0.0
        %928 = vmatprep.subr.mxu0 0.0
        %929 = vmatpush1.msra.mxu0 0.0
        %930 = vmatprep.subr.mxu0 0.0
        %931 = vmatpush1.msra.mxu0 0.0
        %932 = vmatprep.subr.mxu0 0.0
        %933 = vmatpush1.msra.mxu0 0.0
        %934 = vmatprep.subr.mxu0 0.0
        %935 = vmatpush1.msra.mxu0 0.0
        %936 = vmatprep.subr.mxu0 0.0
        %937 = vmatpush1.msra.mxu0 0.0
        %938 = vmatprep.subr.mxu0 0.0
        %939 = vmatpush1.msra.mxu0 0.0
        %940 = vmatprep.subr.mxu0 0.0
        %941 = vmatpush1.msra.mxu0 0.0
        %942 = vmatprep.subr.mxu0 0.0
        %943 = vmatpush1.msra.mxu0 0.0
        %944 = vmatprep.subr.mxu0 0.0
        %945 = vmatpush1.msra.mxu0 0.0
        %946 = vmatprep.subr.mxu0 0.0
        %947 = vmatpush1.msra.mxu0 0.0
        %948 = vmatprep.subr.mxu0 0.0
        %949 = vmatpush1.msra.mxu0 %v913
        %950 = vmatprep.subr.mxu0 0.0
        %951 = vmatpush2.msra.mxu0 0.0
        %952 = vmatprep.subr.mxu0 0.0
        %953 = vmatpush2.msra.mxu0 0.0
        %954 = vmatprep.subr.mxu0 0.0
        %955 = vmatpush2.msra.mxu0 0.0
        %956 = vmatprep.subr.mxu0 0.0
        %957 = vmatpush2.msra.mxu0 0.0
        %958 = vmatprep.subr.mxu0 0.0
        %959 = vmatpush2.msra.mxu0 0.0
        %960 = vmatprep.subr.mxu0 0.0
        %961 = vmatpush2.msra.mxu0 0.0
        %962 = vmatprep.subr.mxu0 0.0
        %963 = vmatpush2.msra.mxu0 0.0
        %964 = vmatprep.subr.mxu0 0.0
        %965 = vmatpush2.msra.mxu0 0.0
        %966 = vmatprep.subr.mxu0 0.0
        %967 = vmatpush2.msra.mxu0 0.0
        %968 = vmatprep.subr.mxu0 0.0
        %969 = vmatpush2.msra.mxu0 0.0
        %970 = vmatprep.subr.mxu0 0.0
        %971 = vmatpush2.msra.mxu0 0.0
        %972 = vmatprep.subr.mxu0 0.0
        %973 = vmatpush2.msra.mxu0 0.0
        %974 = vmatprep.subr.mxu0 0.0
        %975 = vmatpush2.msra.mxu0 0.0
        %976 = vmatprep.subr.mxu0 0.0
        %977 = vmatpush2.msra.mxu0 0.0
        %978 = vmatprep.subr.mxu0 0.0
        %979 = vmatpush2.msra.mxu0 0.0
        %980 = vmatprep.subr.mxu0 0.0
        %981 = vmatpush2.msra.mxu0 0.0
        %982 = vmatprep.mubr.f32.mxu0 0.0
        %983 = vmatmul.mubr.f32.gmra.mxu0 %v916
        %v984 = vpop.f32.mrf.mxu0
        %v985 = vadd.f32 0.0, %v984
        %v986 = vpop.f32.mrf.mxu0
        %987 = vdwg.mxu0
        %v989 = vlaneseq
        %v990 = vshrl.u32 %v989, 7
        %v991 = vsub.s32 0, %v990
        %v992 = vrot.slane %v742, %v991
        %v995 = vsel %vm408, %v985, 0
        %997 = vmatprep.subr.mxu0 0.0
        %998 = vmatpush1.msra.mxu0 0.0
        %999 = vmatprep.subr.mxu0 0.0
        %1000 = vmatpush1.msra.mxu0 0.0
        %1001 = vmatprep.subr.mxu0 0.0
        %1002 = vmatpush1.msra.mxu0 0.0
        %1003 = vmatprep.subr.mxu0 0.0
        %1004 = vmatpush1.msra.mxu0 0.0
        %1005 = vmatprep.subr.mxu0 0.0
        %1006 = vmatpush1.msra.mxu0 0.0
        %1007 = vmatprep.subr.mxu0 0.0
        %1008 = vmatpush1.msra.mxu0 0.0
        %1009 = vmatprep.subr.mxu0 0.0
        %1010 = vmatpush1.msra.mxu0 0.0
        %1011 = vmatprep.subr.mxu0 0.0
        %1012 = vmatpush1.msra.mxu0 0.0
        %1013 = vmatprep.subr.mxu0 0.0
        %1014 = vmatpush1.msra.mxu0 0.0
        %1015 = vmatprep.subr.mxu0 0.0
        %1016 = vmatpush1.msra.mxu0 0.0
        %1017 = vmatprep.subr.mxu0 0.0
        %1018 = vmatpush1.msra.mxu0 0.0
        %1019 = vmatprep.subr.mxu0 0.0
        %1020 = vmatpush1.msra.mxu0 0.0
        %1021 = vmatprep.subr.mxu0 0.0
        %1022 = vmatpush1.msra.mxu0 %v740
        %1023 = vmatprep.subr.mxu0 0.0
        %1024 = vmatpush1.msra.mxu0 %v739
        %1025 = vmatprep.subr.mxu0 0.0
        %1026 = vmatpush1.msra.mxu0 %v738
        %1027 = vmatprep.subr.mxu0 0.0
        %1028 = vmatpush1.msra.mxu0 %v737
        %1029 = vmatprep.subr.mxu0 0.0
        %1030 = vmatpush2.msra.mxu0 0.0
        %1031 = vmatprep.subr.mxu0 0.0
        %1032 = vmatpush2.msra.mxu0 0.0
        %1033 = vmatprep.subr.mxu0 0.0
        %1034 = vmatpush2.msra.mxu0 0.0
        %1035 = vmatprep.subr.mxu0 0.0
        %1036 = vmatpush2.msra.mxu0 0.0
        %1037 = vmatprep.subr.mxu0 0.0
        %1038 = vmatpush2.msra.mxu0 0.0
        %1039 = vmatprep.subr.mxu0 0.0
        %1040 = vmatpush2.msra.mxu0 0.0
        %1041 = vmatprep.subr.mxu0 0.0
        %1042 = vmatpush2.msra.mxu0 0.0
        %1043 = vmatprep.subr.mxu0 0.0
        %1044 = vmatpush2.msra.mxu0 0.0
        %1045 = vmatprep.subr.mxu0 0.0
        %1046 = vmatpush2.msra.mxu0 0.0
        %1047 = vmatprep.subr.mxu0 0.0
        %1048 = vmatpush2.msra.mxu0 0.0
        %1049 = vmatprep.subr.mxu0 0.0
        %1050 = vmatpush2.msra.mxu0 0.0
        %1051 = vmatprep.subr.mxu0 0.0
        %1052 = vmatpush2.msra.mxu0 0.0
        %1053 = vmatprep.subr.mxu0 0.0
        %1054 = vmatpush2.msra.mxu0 0.0
        %1055 = vmatprep.subr.mxu0 0.0
        %1056 = vmatpush2.msra.mxu0 0.0
        %1057 = vmatprep.subr.mxu0 0.0
        %1058 = vmatpush2.msra.mxu0 0.0
        %1059 = vmatprep.subr.mxu0 0.0
        %1060 = vmatpush2.msra.mxu0 0.0
        %1061 = vmatprep.mubr.f32.mxu0 0.0
        %1062 = vmatmul.mubr.f32.gmra.mxu0 %v995
        %v1063 = vpop.f32.mrf.mxu0
        %v1064 = vadd.f32 %v992, %v1063
        %v1065 = vpop.f32.mrf.mxu0
        %1066 = vdwg.mxu0
        %v1067 = vmax.f32 %v1064, 0.0
        %1069 = vrot.lane.b32.xlu0 %v1067, 32
        %v1070 = vpop.permute.xlu0 %1069
        %vm1072 = vcmask 523520
        %1073 = vst.msk [vmem:[#allocation2] sm:$0xff] %vm1072, %v1070
        %s1074 = sld [smem:[#allocation4 + %s30]]
        %s1075 = scalar_lea.vmem [#allocation2], %s1074
        %v1076 = vld [vmem:[%s1075] sm:$0x1]
        %vm1077 = vcmask 516096
        %1078 = vst.msk [vmem:[%s305] sm:$0x1] %vm1077, %v1076
        %s1079 = sand.u32 %s190, 1
        %s1080 = scalar_lea.sflag [#allocation7], %s1079
        %s1081 = sand.u32 %s190, 1
        %s1082 = scalar_lea.vmem [#allocation10], %s1081
        // Predicated region
        $region57: #{tpu_custom_call.1} parent=47 // pred_check
          %p1083 = pneg %p200
        $region58: #{tpu_custom_call.1} parent=47 // pred_check_branch
          %1085 = sbr.rel (%p1083) target = $region60
        $region59: #{tpu_custom_call.1} parent=47 // pred_region
          %s1087 = ssub.s32 16, 16
          %1088 = vsyncadd %s1080, %s1087
          %s1089 = smul.addr %s30, 16
          %s1090 = scalar_lea.hbm %s8, %s1089
          %s1092 = sshll.u32 %s1082, 4
          %s1093 = int_to_ptr.vmem [resolvable:$true] %s1092
          %1095 = dma.vmem_to_hbm [thread:$0]  %s1093, 16, %s1090, %s1080
        $region60: #{tpu_custom_call.1} parent=47 // pred_fallthru
          _
      $region48: #{tpu_custom_call.1} parent=5 // pred_fallthru
        _
      %p1096 = scmp.le.s32.totalorder 2, %s25
      // Predicated region
      $region61: #{tpu_custom_call.1} parent=5 // pred_check
        %p1097 = pneg %p1096
      $region62: #{tpu_custom_call.1} parent=5 // pred_check_branch
        %1099 = sbr.rel (%p1097) target = $region64
      $region63: #{tpu_custom_call.1} parent=5 // pred_region
        %s1100 = ssub.s32 %s25, 2
        // Predicated region
        $region65: #{tpu_custom_call.1} parent=63 // pred_check
          %p1101 = pneg %p206
        $region66: #{tpu_custom_call.1} parent=63 // pred_check_branch
          %1103 = sbr.rel (%p1101) target = $region68
        $region67: #{tpu_custom_call.1} parent=63 // pred_region
          %s1104 = sand.u32 %s191, 1
          %s1105 = scalar_lea.sflag [#allocation7], %s1104
          %s1106 = sand.u32 %s191, 1
          %s1107 = scalar_lea.vmem [#allocation10], %s1106
          %1108 = dma.done %s1105, 16
        $region68: #{tpu_custom_call.1} parent=63 // pred_fallthru
          _
      $region64: #{tpu_custom_call.1} parent=5 // pred_fallthru
        _
    $region6: #{tpu_custom_call.1} parent=1 // loop_footer
      %s29 = sadd.s32 1, %s25
    $region7: #{tpu_custom_call.1} parent=1 // loop_footer_branch
      %24 = sbr.rel target = $region3
    $region8: #{tpu_custom_call.1} parent=1 // loop_exit
      _
    %1109 = vsyncpa [#allocation6], 1
    %s1110 = scalar_lea.sflag [#allocation6], 1
    %1111 = vsyncpa %s1110, 1
    %1112 = vsyncpa [#allocation9], 1
    %1113 = vsyncpa [#allocation7], 1
    %s1114 = scalar_lea.sflag [#allocation7], 1
    %1115 = vsyncpa %s1114, 1

</llo_original>
